<compile_context>
chip_gen: v7x
topology: tpu7x:2x2x1
jax: 0.10.0
libtpu: 0.0.40
codegen_flags: <defaults>
</compile_context>

<pallas_src>
import numpy as np
import jax
import jax.numpy as jnp
from jax.experimental import pallas as pl
from jax.experimental.pallas import tpu as pltpu


# ------------------------------ tiling helpers ------------------------------

_LANE = 128
_SUBLANE = 8
_TM_CAP = 512          # row-tile cap (multiple of 8)
_TN_CAP = 1024         # output-column-tile cap (multiple of 128)
_COMPUTE_DTYPE = jnp.bfloat16   # MXU-native operand dtype; accumulation stays f32


def _round_up(x, m):
    return ((x + m - 1) // m) * m


def _cdiv(a, b):
    return -(-a // b)


_VMEM_BUDGET = None


def _vmem_budget_bytes():
    """~75% of this generation's physical VMEM (v5e/v6e 128 MiB, v7x 64 MiB)."""
    global _VMEM_BUDGET
    if _VMEM_BUDGET is None:
        default = 48 * 1024 * 1024            # safe on every generation
        try:
            cap = getattr(pltpu.get_tpu_info(), "vmem_capacity_bytes", None)
            _VMEM_BUDGET = int(cap) * 3 // 4 if cap else default
        except Exception:
            _VMEM_BUDGET = default
    return _VMEM_BUDGET


_BUFFERED_ONE_OK = None


def _buffered_one_supported():
    """Probe once whether pipeline_mode=pl.Buffered(1) lowers on this jax/TPU."""
    global _BUFFERED_ONE_OK
    if _BUFFERED_ONE_OK is None:
        try:
            def _k(x_ref, o_ref):
                o_ref[...] = x_ref[...]
            out = pl.pallas_call(
                _k,
                out_shape=jax.ShapeDtypeStruct((8, 128), jnp.float32),
                grid=(1,),
                in_specs=[pl.BlockSpec((8, 128), lambda i: (0, 0),
                                       pipeline_mode=pl.Buffered(1))],
                out_specs=pl.BlockSpec((8, 128), lambda i: (0, 0)),
            )(jnp.zeros((8, 128), jnp.float32))
            jax.block_until_ready(out)
            _BUFFERED_ONE_OK = True
        except Exception:
            _BUFFERED_ONE_OK = False
    return _BUFFERED_ONE_OK


def _resident_spec(shape, index_map):
    """BlockSpec for a block whose index never changes: single-buffer if possible."""
    if _buffered_one_supported():
        return pl.BlockSpec(shape, index_map, pipeline_mode=pl.Buffered(1))
    return pl.BlockSpec(shape, index_map)


def _compiler_params(dim_sem, vmem_bytes_estimate):
    budget = _vmem_budget_bytes()
    vmem = int(min(max(2 * vmem_bytes_estimate, 16 * 1024 * 1024), budget))
    return pltpu.CompilerParams(dimension_semantics=dim_sem,
                                vmem_limit_bytes=vmem)


def _pick_row_tile(n, cap=_TM_CAP):
    padded = _round_up(n, _SUBLANE)
    if padded <= cap:
        return padded
    ntiles = _cdiv(n, cap)
    return _round_up(_cdiv(n, ntiles), _SUBLANE)     # minimal-padding tile <= cap


def _pad_cols(size, cap=_TN_CAP):
    """Padded column count: multiple of 128 that tiles evenly with a near-cap tile."""
    padded = _round_up(size, _LANE)
    if padded <= cap:
        return padded
    ntiles = _cdiv(size, cap)
    return ntiles * _round_up(_cdiv(size, ntiles), _LANE)


def _pick_col_tile(op, cap=_TN_CAP):
    """Largest multiple-of-128 tile <= cap dividing op (op is a multiple of 128)."""
    if op <= cap:
        return op
    for k in range(2, op // _LANE + 1):
        cand = op // k
        if op % k == 0 and cand % _LANE == 0 and cand <= cap:
            return cand
    return _LANE


def _pad_to(a, shape):
    pads = [(0, s - d) for d, s in zip(a.shape, shape)]
    if all(p == (0, 0) for p in pads):
        return a
    return jnp.pad(a, pads)


# ------------------------------ Pallas kernels -------------------------------

def _linear_kernel(x_ref, wt_ref, o_ref):
    # x: (TM, D) bf16, wt: (D, TN) bf16 -> o: (TM, TN); MXU with f32 accumulation.
    o_ref[...] = jnp.dot(x_ref[...], wt_ref[...],
                         preferred_element_type=jnp.float32).astype(o_ref.dtype)


def _tail_kernel(x_ref, w1t_ref, w2t_ref, o_ref, h_ref):
    # Fused 2-matmul tail.  w1^T is resident; the (TM, Dip) intermediate lives
    # in an f32 VMEM scratch computed once per row tile at j == 0.
    # INVARIANT: the column grid axis MUST stay sequential ("arbitrary") --
    # marking it "parallel" would race on the shared h scratch.
    @pl.when(pl.program_id(1) == 0)
    def _():
        h_ref[...] = jnp.dot(x_ref[...], w1t_ref[...],
                             preferred_element_type=jnp.float32)
    # TODO(synk): nn.Dropout between the two linears is identity in eval mode.
    o_ref[...] = jnp.dot(h_ref[...].astype(jnp.bfloat16), w2t_ref[...],
                         preferred_element_type=jnp.float32).astype(o_ref.dtype)


# ------------------------------ kernel launchers ------------------------------

def pallas_linear(x, wt, out_dim, out_dtype=jnp.float32):
    """out = (x @ wt)[:, :out_dim].  x: (N, D) bf16, wt: (D, Op) bf16, Op % 128 == 0.

    The exact (N, out_dim) output is written directly (boundary blocks are
    masked by Pallas), so there is no post-kernel pad/slice copy.
    """
    N, D = x.shape
    Op = wt.shape[1]
    itx = x.dtype.itemsize
    itw = wt.dtype.itemsize
    ito = np.dtype(out_dtype).itemsize
    budget = _vmem_budget_bytes()
    out_shape = jax.ShapeDtypeStruct((N, out_dim), out_dtype)

    # TODO(synk): add K-tiling of the D contraction (extra "arbitrary" grid axis
    # + f32 acc scratch) for very large input_dim on v7x's 64 MiB VMEM.

    tm = _pick_row_tile(N)

    # ---- resident-weight path: whole wt pinned in VMEM, 1-D grid over rows ----
    w_copies = 1 if _buffered_one_supported() else 2

    def res_est(tm_):
        return w_copies * D * Op * itw + 2 * tm_ * (D * itx + Op * ito)

    tm_r = tm
    while tm_r > 64 and res_est(tm_r) > budget:
        tm_r = max(64, _round_up(tm_r // 2, _SUBLANE))
    if res_est(tm_r) <= budget:
        return pl.pallas_call(
            _linear_kernel,
            out_shape=out_shape,
            grid_spec=pltpu.PrefetchScalarGridSpec(
                num_scalar_prefetch=0,
                grid=(_cdiv(N, tm_r),),
                in_specs=[pl.BlockSpec((tm_r, D), lambda i: (i, 0)),
                          _resident_spec((D, Op), lambda i: (0, 0))],
                out_specs=pl.BlockSpec((tm_r, Op), lambda i: (i, 0)),
            ),
            compiler_params=_compiler_params(("parallel",), res_est(tm_r)),
        )(x, wt)

    # ---- streamed path: 2-D grid over (rows, cols), both axes "parallel" ----
    tn = _pick_col_tile(Op)

    def est(tm_, tn_):
        return 2 * (tm_ * D * itx + D * tn_ * itw + tm_ * tn_ * ito)

    while est(tm, tn) > budget:
        if tn >= 2 * _LANE:
            tn //= 2
        elif tm > _SUBLANE:
            tm = max(_SUBLANE, _round_up(tm // 2, _SUBLANE))
        else:
            break
    rows, cols = _cdiv(N, tm), Op // tn
    # The inner grid axis revisits constant-index blocks without re-DMA; the
    # outer axis forces re-streaming -> put the cheaper-to-restream operand on
    # the outer axis (matters most on v5e's lower HBM bandwidth).
    if D * Op * itw * rows <= N * D * itx * cols:
        grid = (rows, cols)                     # weight re-read once per row tile
        x_spec = pl.BlockSpec((tm, D), lambda i, j: (i, 0))
        w_spec = pl.BlockSpec((D, tn), lambda i, j: (0, j))
        o_spec = pl.BlockSpec((tm, tn), lambda i, j: (i, j))
    else:
        grid = (cols, rows)                     # x re-read once per column tile
        x_spec = pl.BlockSpec((tm, D), lambda j, i: (i, 0))
        w_spec = pl.BlockSpec((D, tn), lambda j, i: (0, j))
        o_spec = pl.BlockSpec((tm, tn), lambda j, i: (i, j))
    return pl.pallas_call(
        _linear_kernel,
        out_shape=out_shape,
        grid_spec=pltpu.PrefetchScalarGridSpec(
            num_scalar_prefetch=0,
            grid=grid,
            in_specs=[x_spec, w_spec],
            out_specs=o_spec,
        ),
        compiler_params=_compiler_params(("parallel", "parallel"), est(tm, tn)),
    )(x, wt)


def _pallas_tail_fused(x, w1t, w2t, out_dim):
    N, D = x.shape
    Dip = w1t.shape[1]
    Op = w2t.shape[1]
    itx, itw = x.dtype.itemsize, w1t.dtype.itemsize
    budget = _vmem_budget_bytes()
    w1_copies = 1 if _buffered_one_supported() else 2

    tm = _pick_row_tile(N)
    tn = _pick_col_tile(Op)

    def est(tm_, tn_):
        return (2 * tm_ * D * itx + w1_copies * D * Dip * itw
                + 2 * Dip * tn_ * itw + 2 * tm_ * tn_ * 4 + 4 * tm_ * Dip)

    while est(tm, tn) > budget:
        if tn >= 2 * _LANE:
            tn //= 2
        elif tm > _SUBLANE:
            tm = max(_SUBLANE, _round_up(tm // 2, _SUBLANE))
        else:
            break
    rows, cols = _cdiv(N, tm), Op // tn
    return pl.pallas_call(
        _tail_kernel,
        out_shape=jax.ShapeDtypeStruct((N, out_dim), jnp.float32),
        grid_spec=pltpu.PrefetchScalarGridSpec(
            num_scalar_prefetch=0,
            grid=(rows, cols),
            in_specs=[pl.BlockSpec((tm, D), lambda i, j: (i, 0)),    # resident over j
                      _resident_spec((D, Dip), lambda i, j: (0, 0)),  # w1^T resident
                      pl.BlockSpec((Dip, tn), lambda i, j: (0, j))],  # w2^T streamed
            out_specs=pl.BlockSpec((tm, tn), lambda i, j: (i, j)),
            scratch_shapes=[pltpu.VMEM((tm, Dip), jnp.float32)],
        ),
        # column axis must stay sequential: shared h scratch (see _tail_kernel)
        compiler_params=_compiler_params(("parallel", "arbitrary"), est(tm, tn)),
    )(x, w1t, w2t)


def pallas_tail(x, w1t, w2t, out_dim):
    """Tail projection ((x @ w1t) @ w2t)[:, :out_dim]."""
    N = x.shape[0]
    Dip, Op = w1t.shape[1], w2t.shape[1]
    rows = _cdiv(N, _pick_row_tile(N))
    cols = Op // _pick_col_tile(Op)
    if rows == 1 and cols > 1:
        # Only one row tile: the fused kernel's column axis has to stay
        # sequential (h scratch), which would leave one v7x TensorCore idle and
        # make the j==0 step ~2x longer than the rest.  Split into two calls so
        # the wide second matmul gets a fully "parallel" 2-D grid.
        h = pallas_linear(x, w1t, out_dim=Dip, out_dtype=jnp.bfloat16)
        return pallas_linear(h, w2t, out_dim=out_dim, out_dtype=jnp.float32)
    return _pallas_tail_fused(x, w1t, w2t, out_dim)


# ------------------------------- module wrapper ------------------------------

def _xavier_uniform(key, out_f, in_f, dtype=jnp.float32):
    bound = float(np.sqrt(6.0 / (in_f + out_f)))
    return jax.random.uniform(key, (out_f, in_f), dtype=dtype,
                              minval=-bound, maxval=bound)


class AdaptiveSoftmaxPallas:
    def __init__(self, vocab_size, input_dim, cutoff, dropout, key):
        cutoff = list(cutoff)
        if vocab_size > cutoff[-1]:
            cutoff = cutoff + [vocab_size]
        else:
            assert vocab_size == cutoff[-1], \
                'cannot specify cutoff smaller than vocab size'
        self.vocab_size = vocab_size
        self.cutoff = cutoff
        self.dropout = dropout            # eval mode: identity
        self.input_dim = input_dim
        self.compute_dtype = _COMPUTE_DTYPE

        output_dim = cutoff[0] + len(cutoff) - 1
        self.head_out_dim = output_dim
        n_tail = len(cutoff) - 1
        keys = jax.random.split(key, 1 + 2 * n_tail)

        # head: Linear(input_dim, output_dim, bias=False)
        self.head_w = _xavier_uniform(keys[0], output_dim, input_dim)   # f32 reference
        # transpose + lane-pad + bf16 cast ONCE (hoisted out of forward)
        self.head_wt = _pad_to(self.head_w.T,
                               (input_dim, _pad_cols(output_dim))
                               ).astype(self.compute_dtype)

        # tails: Linear(D, D//4**i) -> Dropout -> Linear(D//4**i, cutoff[i+1]-cutoff[i])
        self.tail_w = []          # raw PyTorch-layout f32 weights (reference)
        self.tail_wt = []         # (w1t_pad, w2t_pad, o_i) bf16 kernel operands
        for i in range(n_tail):
            d_i = input_dim // (4 ** i)
            o_i = cutoff[i + 1] - cutoff[i]
            w1 = _xavier_uniform(keys[1 + 2 * i], d_i, input_dim)
            w2 = _xavier_uniform(keys[2 + 2 * i], o_i, d_i)
            self.tail_w.append((w1, w2))
            d_i_pad = _pad_cols(d_i)
            o_i_pad = _pad_cols(o_i)
            w1t = _pad_to(w1.T, (input_dim, d_i_pad)).astype(self.compute_dtype)
            w2t = _pad_to(w2.T, (d_i_pad, o_i_pad)).astype(self.compute_dtype)
            self.tail_wt.append((w1t, w2t, o_i))

    # ----- data-dependent target adaptation (host-side glue, numpy) -----
    def adapt_target(self, target):
        target = np.asarray(target).reshape(-1).astype(np.int64)
        new_target = [target.copy()]
        target_idxs = []
        for i in range(len(self.cutoff) - 1):
            mask = (target >= self.cutoff[i]) & (target < self.cutoff[i + 1])
            # matches fairseq v0.5.0 exactly (the "- 1" offset is in the spec)
            new_target[0][mask] = self.cutoff[0] + i - 1
            if mask.any():
                target_idxs.append(np.nonzero(mask)[0].astype(np.int32))
                new_target.append(
                    jnp.asarray(target[mask] - self.cutoff[i], dtype=jnp.int32))
            else:
                target_idxs.append(None)
                new_target.append(None)
        new_target[0] = jnp.asarray(new_target[0], dtype=jnp.int32)
        return new_target, target_idxs

    # ----- tail launcher -----
    def _tail(self, x, i, idxs):
        n_sel = int(idxs.shape[0])
        # Bucket the ragged row count to a power of two (>= 8): bounds the set
        # of compiled tail-kernel shapes and keeps sublane alignment.
        n_bucket = max(_SUBLANE, int(pl.next_power_of_2(n_sel)))
        idxs_padded = np.zeros((n_bucket,), dtype=np.int32)
        idxs_padded[:n_sel] = idxs
        # TODO(synk): could fuse this gather into the kernel via scalar-prefetched
        # row indices + manual DMA instead of materializing x_sel.
        x_sel = jnp.take(x, jnp.asarray(idxs_padded), axis=0)
        w1t, w2t, o_i = self.tail_wt[i]
        out = pallas_tail(x_sel, w1t, w2t, o_i)
        return out[:n_sel]

    # ----- forward -----
    def forward(self, inputs, target):
        # inputs: (b, t, d), target: (b, t)
        d = inputs.shape[-1]
        # F.dropout(training=False) -> identity; bf16 cast once, shared by head + tails
        x = inputs.reshape(-1, d).astype(self.compute_dtype)
        new_target, target_idxs = self.adapt_target(target)

        output = [pallas_linear(x, self.head_wt, self.head_out_dim)]
        for i, idxs in enumerate(target_idxs):
            if idxs is not None:
                output.append(self._tail(x, i, idxs))
            else:
                output.append(None)
        return output, new_target


# ----------------------------------- main ------------------------------------

def _bf16_round64(a):
    """Round to bf16 then widen to float64 (mirrors kernel operand quantization)."""
    return np.asarray(jnp.asarray(a, jnp.bfloat16).astype(jnp.float32),
                      dtype=np.float64)


if __name__ == "__main__":
    key = jax.random.PRNGKey(0)
    k_in, k_tgt, k_par = jax.random.split(key, 3)

    b, t, d = 2, 8, 32
    vocab_size = 24
    cutoff = [8, 16]            # -> internally [8, 16, 24]

    model = AdaptiveSoftmaxPallas(vocab_size, d, list(cutoff),
                                  dropout=0.1, key=k_par)

    inputs = jax.random.normal(k_in, (b, t, d), dtype=jnp.float32)
    target = jax.random.randint(k_tgt, (b, t), 0, vocab_size, dtype=jnp.int32)

    output, new_target = model.forward(inputs, target)

    # block on all produced arrays
    for o in output:
        if o is not None:
            jax.block_until_ready(o)
    for nt in new_target:
        if nt is not None:
            jax.block_until_ready(nt)

    # correctness check against a host-side reference with bf16-quantized operands
    x_r = _bf16_round64(np.asarray(inputs).reshape(-1, d))
    head_ref = x_r @ _bf16_round64(model.head_w).T
    np.testing.assert_allclose(np.asarray(output[0], dtype=np.float64), head_ref,
                               rtol=1e-3, atol=1e-3)

    tgt_flat = np.asarray(target).reshape(-1)
    for i in range(len(model.cutoff) - 1):
        if output[i + 1] is not None:
            mask = (tgt_flat >= model.cutoff[i]) & (tgt_flat < model.cutoff[i + 1])
            x_sel = x_r[np.nonzero(mask)[0]]
            w1, w2 = model.tail_w[i]
            h = _bf16_round64(x_sel @ _bf16_round64(w1).T)   # kernel feeds h as bf16
            ref = h @ _bf16_round64(w2).T
            np.testing.assert_allclose(np.asarray(output[i + 1], dtype=np.float64),
                                       ref, rtol=2e-2, atol=2e-2)

    print("KERNEL_OK")
</pallas_src>

<mosaic_0001>
module attributes {stable_mosaic.version = 11 : i64} {
  func.func @_k(%arg0: i32, %arg1: memref<8x128xf32, #tpu.memory_space<vmem>>, %arg2: memref<8x128xf32, #tpu.memory_space<vmem>>) attributes {dimension_semantics = [#tpu.dimension_semantics<arbitrary>], iteration_bounds = array<i64: 1>, scalar_prefetch = 0 : i64, scratch_operands = 0 : i64, tpu.core_type = #tpu.core_type<tc>, window_params = [{pipeline_mode = #tpu.pipeline_mode<synchronous>, transform_indices = @transform_0, window_bounds = array<i64: 8, 128>}, {pipeline_mode = #tpu.pipeline_mode<synchronous>, transform_indices = @transform_1, window_bounds = array<i64: 8, 128>}]} {
    %c0 = arith.constant 0 : index
    %c0_0 = arith.constant 0 : index
    %0 = vector.load %arg1[%c0, %c0_0] : memref<8x128xf32, #tpu.memory_space<vmem>>, vector<8x128xf32>
    %c0_1 = arith.constant 0 : index
    %c0_2 = arith.constant 0 : index
    %1 = vector.load %arg2[%c0_1, %c0_2] : memref<8x128xf32, #tpu.memory_space<vmem>>, vector<8x128xf32>
    tpu.vector_store %arg2[%c0_1, %c0_2], %0 {strides = array<i32>} : memref<8x128xf32, #tpu.memory_space<vmem>>, vector<8x128xf32>,
    return
  }
  func.func @transform_0(%arg0: i32) -> (i32, i32) {
    %c0_i32 = arith.constant 0 : i32
    %c0_i32_0 = arith.constant 0 : i32
    %c0_i32_1 = arith.constant 0 : i32
    return %c0_i32, %c0_i32_0 : i32, i32
  }
  func.func @transform_1(%arg0: i32) -> (i32, i32) {
    %c0_i32 = arith.constant 0 : i32
    %c0_i32_0 = arith.constant 0 : i32
    %c0_i32_1 = arith.constant 0 : i32
    return %c0_i32, %c0_i32_0 : i32, i32
  }
}

module attributes {stable_mosaic.version = 11 : i64} {
  func.func @_linear_kernel(%arg0: i32, %arg1: memref<16x32xbf16, #tpu.memory_space<vmem>>, %arg2: memref<32x128xbf16, #tpu.memory_space<vmem>>, %arg3: memref<16x128xf32, #tpu.memory_space<vmem>>) attributes {dimension_semantics = [#tpu.dimension_semantics<parallel>], iteration_bounds = array<i64: 1>, scalar_prefetch = 0 : i64, scratch_operands = 0 : i64, tpu.core_type = #tpu.core_type<tc>, window_params = [{transform_indices = @transform_0, window_bounds = array<i64: 16, 32>}, {pipeline_mode = #tpu.pipeline_mode<synchronous>, transform_indices = @transform_1, window_bounds = array<i64: 32, 128>}, {transform_indices = @transform_2, window_bounds = array<i64: 16, 128>}]} {
    %c0 = arith.constant 0 : index
    %c0_0 = arith.constant 0 : index
    %0 = vector.load %arg1[%c0, %c0_0] : memref<16x32xbf16, #tpu.memory_space<vmem>>, vector<16x32xbf16>
    %c0_1 = arith.constant 0 : index
    %c0_2 = arith.constant 0 : index
    %1 = vector.load %arg2[%c0_1, %c0_2] : memref<32x128xbf16, #tpu.memory_space<vmem>>, vector<32x128xbf16>
    %cst = arith.constant dense<0.000000e+00> : vector<16x128xf32>
    %2 = tpu.matmul %0, %1, %cst {dimension_numbers = #tpu.dot_dimension_numbers<[1], [0], [0], [1], [0, 0, 1, 1], [], []>} : vector<16x32xbf16>, vector<32x128xbf16>, vector<16x128xf32> -> vector<16x128xf32>
    %c0_3 = arith.constant 0 : index
    %c0_4 = arith.constant 0 : index
    %3 = vector.load %arg3[%c0_3, %c0_4] : memref<16x128xf32, #tpu.memory_space<vmem>>, vector<16x128xf32>
    tpu.vector_store %arg3[%c0_3, %c0_4], %2 {strides = array<i32>} : memref<16x128xf32, #tpu.memory_space<vmem>>, vector<16x128xf32>,
    return
  }
  func.func @transform_0(%arg0: i32) -> (i32, i32) {
    %c0_i32 = arith.constant 0 : i32
    %c0_i32_0 = arith.constant 0 : i32
    return %arg0, %c0_i32 : i32, i32
  }
  func.func @transform_1(%arg0: i32) -> (i32, i32) {
    %c0_i32 = arith.constant 0 : i32
    %c0_i32_0 = arith.constant 0 : i32
    %c0_i32_1 = arith.constant 0 : i32
    return %c0_i32, %c0_i32_0 : i32, i32
  }
  func.func @transform_2(%arg0: i32) -> (i32, i32) {
    %c0_i32 = arith.constant 0 : i32
    %c0_i32_0 = arith.constant 0 : i32
    return %arg0, %c0_i32 : i32, i32
  }
}

</mosaic_0001>

<llo_original>
// kernel: tpu_custom_call.1
$region0: #{tpu_custom_call.1}
  #allocation0 [shape = 'u32[]', space=smem, size = 0x4, offset = 0x4, fixed_abs, tag = 'smem constant byte address 0x4 - core index']
  #allocation1 [shape = 'u32[144,128]{1,0:T(1,128)}', space=vmem, size = 0x12000, scoped, tag = 'internal scratch']
  %s0 = inlined_call_operand.hbm [shape: f32[8,128], index: 0, kind: input, shape index: {}]
  %s1 = inlined_call_operand.hbm [shape: f32[8,128], index: 1, kind: output, shape index: {}]
  %s2 = sld [smem:[#allocation0]]
  $region18: #{tpu_custom_call.1} parent=0
    _
  %s4 = ssub.s32 1, %s2
  %s5 = scalar_select 0, %s4, %s2
  $region1: #{tpu_custom_call.1} parent=0
    #allocation2 [shape = 'u8[4096]{0}', space=vmem, size = 0x1000, scoped, tag = 'input window, operand 0, single buffered']
    #allocation3 [shape = 's32[1]{0}', space=sflag, size = 0x4, scoped, tag = 'scoped memory for tpu_custom_call.1']
    #allocation4 [shape = 's32[1]{0}', space=sflag, size = 0x4, scoped, tag = 'scoped memory for tpu_custom_call.1']
    #allocation5 [shape = 'u8[4096]{0}', space=vmem, size = 0x1000, scoped, tag = 'output window, operand 0, single buffered']
    %6 = vsyncpa [#allocation3], 0
    %7 = vsyncpa [#allocation4], 0
    // Predicated region
    $region2: #{tpu_custom_call.1} parent=1 // pred_check
      _
    $region3: #{tpu_custom_call.1} parent=1 // pred_check_branch
      %9 = sbr.rel (0) target = $region5
    $region4: #{tpu_custom_call.1} parent=1 // pred_region
      %s11 = ssub.s32 128, 128
      %12 = vsyncadd [#allocation3], %s11
      %s14 = sshll.u32 [#allocation2], 4
      %s15 = int_to_ptr.vmem [resolvable:$true] %s14
      %17 = dma.hbm_to_vmem [thread:$0]  %s0, 128, %s15, [#allocation3]
    $region5: #{tpu_custom_call.1} parent=1 // pred_fallthru
      _
    // Predicated region
    $region6: #{tpu_custom_call.1} parent=1 // pred_check
      _
    $region7: #{tpu_custom_call.1} parent=1 // pred_check_branch
      %19 = sbr.rel (0) target = $region9
    $region8: #{tpu_custom_call.1} parent=1 // pred_region
      %20 = dma.done [#allocation3], 128
    $region9: #{tpu_custom_call.1} parent=1 // pred_fallthru
      _
    %v21 = vld [vmem:[#allocation2] sm:$0xff]
    %22 = vst [vmem:[#allocation5] sm:$0xff] %v21
    // Predicated region
    $region10: #{tpu_custom_call.1} parent=1 // pred_check
      _
    $region11: #{tpu_custom_call.1} parent=1 // pred_check_branch
      %24 = sbr.rel (0) target = $region13
    $region12: #{tpu_custom_call.1} parent=1 // pred_region
      %s26 = ssub.s32 128, 128
      %27 = vsyncadd [#allocation4], %s26
      %s29 = sshll.u32 [#allocation5], 4
      %s30 = int_to_ptr.vmem [resolvable:$true] %s29
      %32 = dma.vmem_to_hbm [thread:$0]  %s30, 128, %s1, [#allocation4]
    $region13: #{tpu_custom_call.1} parent=1 // pred_fallthru
      _
    // Predicated region
    $region14: #{tpu_custom_call.1} parent=1 // pred_check
      _
    $region15: #{tpu_custom_call.1} parent=1 // pred_check_branch
      %34 = sbr.rel (0) target = $region17
    $region16: #{tpu_custom_call.1} parent=1 // pred_region
      %35 = dma.done [#allocation4], 128
    $region17: #{tpu_custom_call.1} parent=1 // pred_fallthru
      _
    %36 = vsyncpa [#allocation3], 1
    %37 = vsyncpa [#allocation4], 1

// kernel: tpu_custom_call.1
$region0: #{tpu_custom_call.1}
  #allocation0 [shape = 'u32[]', space=smem, size = 0x4, offset = 0x4, fixed_abs, tag = 'smem constant byte address 0x4 - core index']
  #allocation1 [shape = 'u32[144,128]{1,0:T(1,128)}', space=vmem, size = 0x12000, scoped, tag = 'internal scratch']
  %s0 = inlined_call_operand.hbm [shape: bf16[16,32], index: 0, kind: input, shape index: {}]
  %s1 = inlined_call_operand.hbm [shape: bf16[32,128], index: 1, kind: input, shape index: {}]
  %s2 = inlined_call_operand.hbm [shape: f32[16,10], index: 2, kind: output, shape index: {}]
  %s3 = sld [smem:[#allocation0]]
  $region26: #{tpu_custom_call.1} parent=0
    _
  %s5 = ssub.s32 1, %s3
  %s6 = scalar_select 0, %s5, %s3
  $region1: #{tpu_custom_call.1} parent=0
    #allocation2 [shape = 'u8[4096]{0}', space=vmem, size = 0x1000, scoped, tag = 'input window, operand 0, single buffered']
    #allocation3 [shape = 's32[1]{0}', space=sflag, size = 0x4, scoped, tag = 'scoped memory for tpu_custom_call.1']
    #allocation4 [shape = 's32[1]{0}', space=sflag, size = 0x4, scoped, tag = 'scoped memory for tpu_custom_call.1']
    #allocation5 [shape = 'u8[8192]{0}', space=vmem, size = 0x2000, scoped, tag = 'input window, operand 1, single buffered']
    #allocation6 [shape = 's32[1]{0}', space=sflag, size = 0x4, scoped, tag = 'scoped memory for tpu_custom_call.1']
    #allocation7 [shape = 'u8[8192]{0}', space=vmem, size = 0x2000, scoped, tag = 'output window, operand 0, single buffered']
    %7 = vsyncpa [#allocation3], 0
    %8 = vsyncpa [#allocation6], 0
    %9 = vsyncpa [#allocation4], 0
    // Predicated region
    $region2: #{tpu_custom_call.1} parent=1 // pred_check
      _
    $region3: #{tpu_custom_call.1} parent=1 // pred_check_branch
      %11 = sbr.rel (0) target = $region5
    $region4: #{tpu_custom_call.1} parent=1 // pred_region
      %s13 = ssub.s32 128, 128
      %14 = vsyncadd [#allocation3], %s13
      %s15 = sshll.u32 [#allocation2], 4
      %s16 = int_to_ptr.vmem [resolvable:$true] %s15
      %21 = dma.hbm_to_vmem [thread:$0]  %s0, 128, %s16, [#allocation3], 64, 64, 4
    $region5: #{tpu_custom_call.1} parent=1 // pred_fallthru
      _
    // Predicated region
    $region6: #{tpu_custom_call.1} parent=1 // pred_check
      _
    $region7: #{tpu_custom_call.1} parent=1 // pred_check_branch
      %23 = sbr.rel (0) target = $region9
    $region8: #{tpu_custom_call.1} parent=1 // pred_region
      %s25 = ssub.s32 256, 256
      %26 = vsyncadd [#allocation6], %s25
      %s27 = sshll.u32 [#allocation5], 4
      %s28 = int_to_ptr.vmem [resolvable:$true] %s27
      %33 = dma.hbm_to_vmem [thread:$0]  %s1, 256, %s28, [#allocation6], 64, 64, 4
    $region9: #{tpu_custom_call.1} parent=1 // pred_fallthru
      _
    // Predicated region
    $region10: #{tpu_custom_call.1} parent=1 // pred_check
      _
    $region11: #{tpu_custom_call.1} parent=1 // pred_check_branch
      %35 = sbr.rel (0) target = $region13
    $region12: #{tpu_custom_call.1} parent=1 // pred_region
      %36 = dma.done [#allocation3], 128
    $region13: #{tpu_custom_call.1} parent=1 // pred_fallthru
      _
    // Predicated region
    $region14: #{tpu_custom_call.1} parent=1 // pred_check
      _
    $region15: #{tpu_custom_call.1} parent=1 // pred_check_branch
      %38 = sbr.rel (0) target = $region17
    $region16: #{tpu_custom_call.1} parent=1 // pred_region
      %39 = dma.done [#allocation6], 256
    $region17: #{tpu_custom_call.1} parent=1 // pred_fallthru
      _
    %v41 = vld [vmem:[#allocation2] sm:$0xf]
    %v42 = vld [vmem:[#allocation2 + $0x4] sm:$0xf]
    %v43 = vld [vmem:[#allocation5] sm:$0xf]
    %v44 = vld [vmem:[#allocation5 + $0x4] sm:$0xf]
    %v45 = vld [vmem:[#allocation5 + $0x8] sm:$0xf]
    %v46 = vld [vmem:[#allocation5 + $0xc] sm:$0xf]
    %v49 = vunpack.c.l.b16 %v41
    %v50 = vunpack.c.l.b16 %v42
    %v51 = vpack.c.b16 %v50, %v49
    %v56 = vunpack.c.l.b16 %v43
    %v57 = vunpack.c.l.b16 %v44
    %v58 = vunpack.c.l.b16 %v45
    %v59 = vunpack.c.l.b16 %v46
    %v60 = vpack.c.b16 %v57, %v56
    %v61 = vpack.c.b16 %v59, %v58
    %vm64 = vcmask 261120
    %v66 = vsel %vm64, %v51, 0
    %68 = vmatprep.subr.bf16.mxu0 0
    %69 = vmatpush1.bf16.msra.mxu0 %v60
    %70 = vmatprep.subr.bf16.mxu0 0
    %71 = vmatpush1.bf16.msra.mxu0 %v61
    %72 = vmatprep.subr.bf16.mxu0 0
    %73 = vmatpush1.bf16.msra.mxu0 0
    %74 = vmatprep.subr.bf16.mxu0 0
    %75 = vmatpush1.bf16.msra.mxu0 0
    %76 = vmatprep.subr.bf16.mxu0 0
    %77 = vmatpush1.bf16.msra.mxu0 0
    %78 = vmatprep.subr.bf16.mxu0 0
    %79 = vmatpush1.bf16.msra.mxu0 0
    %80 = vmatprep.subr.bf16.mxu0 0
    %81 = vmatpush1.bf16.msra.mxu0 0
    %82 = vmatprep.subr.bf16.mxu0 0
    %83 = vmatpush1.bf16.msra.mxu0 0
    %84 = vmatprep.subr.bf16.mxu0 0
    %85 = vmatpush1.bf16.msra.mxu0 0
    %86 = vmatprep.subr.bf16.mxu0 0
    %87 = vmatpush1.bf16.msra.mxu0 0
    %88 = vmatprep.subr.bf16.mxu0 0
    %89 = vmatpush1.bf16.msra.mxu0 0
    %90 = vmatprep.subr.bf16.mxu0 0
    %91 = vmatpush1.bf16.msra.mxu0 0
    %92 = vmatprep.subr.bf16.mxu0 0
    %93 = vmatpush1.bf16.msra.mxu0 0
    %94 = vmatprep.subr.bf16.mxu0 0
    %95 = vmatpush1.bf16.msra.mxu0 0
    %96 = vmatprep.subr.bf16.mxu0 0
    %97 = vmatpush1.bf16.msra.mxu0 0
    %98 = vmatprep.subr.bf16.mxu0 0
    %99 = vmatpush1.bf16.msra.mxu0 0
    %100 = vmatprep.mubr.bf16.mxu0 0
    %101 = vmatmul.mubr.bf16.gmra.mrb[0].mxu0 %v66
    %v102 = vpop.f32.mrb[0].mxu0
    %v103 = vadd.f32 0.0, %v102
    %v104 = vpop.f32.mrb[0].mxu0
    %v105 = vpop.f32.mrb[0].mxu0
    %v106 = vadd.f32 0.0, %v105
    %v107 = vpop.f32.mrb[0].mxu0
    %108 = vdwg.mxu0
    %109 = vst [vmem:[#allocation7] sm:$0xff] %v103
    %110 = vst [vmem:[#allocation7 + $0x8] sm:$0xff] %v106
    // Predicated region
    $region18: #{tpu_custom_call.1} parent=1 // pred_check
      _
    $region19: #{tpu_custom_call.1} parent=1 // pred_check_branch
      %112 = sbr.rel (0) target = $region21
    $region20: #{tpu_custom_call.1} parent=1 // pred_region
      %s114 = ssub.s32 256, 256
      %115 = vsyncadd [#allocation4], %s114
      %s116 = sshll.u32 [#allocation7], 4
      %s117 = int_to_ptr.vmem [resolvable:$true] %s116
      %122 = dma.vmem_to_hbm [thread:$0]  %s117, 256, %s2, [#allocation4], 128, 128, 8
    $region21: #{tpu_custom_call.1} parent=1 // pred_fallthru
      _
    // Predicated region
    $region22: #{tpu_custom_call.1} parent=1 // pred_check
      _
    $region23: #{tpu_custom_call.1} parent=1 // pred_check_branch
      %124 = sbr.rel (0) target = $region25
    $region24: #{tpu_custom_call.1} parent=1 // pred_region
      %125 = dma.done [#allocation4], 256
    $region25: #{tpu_custom_call.1} parent=1 // pred_fallthru
      _
    %126 = vsyncpa [#allocation3], 1
    %127 = vsyncpa [#allocation6], 1
    %128 = vsyncpa [#allocation4], 1

</llo_original>
